<compile_context>
chip_gen: v7x
topology: tpu7x:2x2x1
jax: 0.10.0
libtpu: 0.0.40
codegen_flags: <defaults>
</compile_context>

<pallas_src>
import functools

import jax
import jax.numpy as jnp
from jax.experimental import pallas as pl
from jax.experimental.pallas import tpu as pltpu


def _round_up(x, m):
    return ((x + m - 1) // m) * m


def _vmem_capacity_bytes():
    """Physical VMEM per core; conservative (v7x) fallback if query fails."""
    try:
        cap = int(pltpu.get_tpu_info().vmem_capacity_bytes)
        if cap >= 32 * 1024 * 1024:
            return cap
    except Exception:
        pass
    return 64 * 1024 * 1024


# --------------------------------- kernels --------------------------------- #


def _mean_kernel(x_ref, xm_ref, acc_ref, *, inv_n, n_total, block_n):
    """Running f32 sum over N chunks; finalize with * (1/N) and cast for MXU."""
    n = pl.program_id(1)

    @pl.when(n == 0)
    def _():
        acc_ref[...] = jnp.zeros_like(acc_ref)

    xb = x_ref[...].astype(jnp.float32)          # (bm_mean, nt, D)
    if n_total % block_n != 0:
        # cdiv grid over N: mask the out-of-bounds rows of the last chunk
        # (their contents are unspecified).
        row = jax.lax.broadcasted_iota(jnp.int32, (1, block_n, 1), 1)
        valid = (n * block_n + row) < n_total
        xb = jnp.where(valid, xb, 0.0)
    acc_ref[...] += jnp.sum(xb, axis=1)

    @pl.when(n == pl.num_programs(1) - 1)
    def _():
        xm_ref[...] = (acc_ref[...] * inv_n).astype(xm_ref.dtype)


def _mlp_kernel(xm_ref, w1_ref, b1_ref, w2_ref, b2_ref, o_ref, acc_ref):
    """One hidden-tile step: relu(xm @ W1_tile + b1_tile) @ W2_tile -> acc.

    When the hidden grid has a single step (weights fully resident), this is
    the whole fused MLP per row tile; the weight block index is constant so
    the weights are DMA'd only once for the entire call.
    """
    j = pl.program_id(1)

    # linear1 partial: (bm, D) @ (D, th) on the MXU, bf16 in / f32 accum.
    h = jnp.dot(xm_ref[...], w1_ref[...], preferred_element_type=jnp.float32)
    # Each hidden column is visited exactly once per row tile, so the bias add
    # + ReLU here is not redundant work.
    h = jnp.maximum(h + b1_ref[...], 0.0)

    # linear2 partial: (bm, th) @ (th, Dp), accumulated across hidden tiles.
    part = jnp.dot(
        h.astype(w2_ref.dtype), w2_ref[...], preferred_element_type=jnp.float32
    )

    @pl.when(j == 0)
    def _():
        acc_ref[...] = part

    @pl.when(j > 0)
    def _():
        acc_ref[...] += part

    @pl.when(j == pl.num_programs(1) - 1)
    def _():
        y = jnp.maximum(acc_ref[...] + b2_ref[...], 0.0)
        # F.normalize(y, dim=1, eps=1e-12) == y * rsqrt(max(sum(y^2), eps^2)).
        sumsq = jnp.sum(y * y, axis=1, keepdims=True)
        inv_norm = jax.lax.rsqrt(jnp.maximum(sumsq, 1e-24))
        o_ref[...] = (y * inv_norm).astype(o_ref.dtype)


# --------------------------------- wrapper --------------------------------- #


def mlp_forward(x, w1, b1, w2, b2):
    """MLP head forward. x: (B, N, D), weights f32. Returns (B, D) f32."""
    B, N, D = x.shape
    H = w1.shape[1]
    assert w1.shape == (D, H) and b1.shape == (1, H)
    assert w2.shape == (H, D) and b2.shape == (1, D)

    f32, bf16 = jnp.float32, jnp.bfloat16
    itemsize = jnp.dtype(x.dtype).itemsize

    Dp = _round_up(D, 128)      # lane-dense output feature dim
    Hp = _round_up(H, 128)      # lane-dense hidden dim

    vmem_cap = _vmem_capacity_bytes()
    x_budget = max(vmem_cap // 4, 4 * 1024 * 1024)     # double-buffered x block
    w_budget = max(vmem_cap // 4, 4 * 1024 * 1024)     # double-buffered weights
    vmem_limit = max(32 * 1024 * 1024,
                     min(vmem_cap - 16 * 1024 * 1024, 3 * vmem_cap // 4))

    # ---- row tiling (divisors of the 8-rounded batch: no padding blowup,
    #      no reliance on out-of-bounds output writes) ----
    if B < 8:
        Br = B                    # full-batch blocks are always legal
        bm2 = B                   # stage-2 MXU row tile
        bm_mean = B               # stage-1 mean row tile
    else:
        Br = _round_up(B, 8)
        m = Br // 8
        d = max(dd for dd in range(1, min(32, m) + 1) if m % dd == 0)
        bm2 = 8 * d               # largest multiple-of-8 divisor of Br, <= 256
        bm_mean = 8

    # ---- stage-1 N chunk: big contiguous slab, within the VMEM budget ----
    if N < 8:
        nt = N
    else:
        nt_cap = max(8, (x_budget // (2 * bm_mean * D * itemsize)) // 8 * 8)
        nt = min((N // 8) * 8, nt_cap)
        # Prefer a chunk size that divides N (less tail waste); mask handles
        # correctness either way.
        t = nt
        while t >= max(8, (3 * nt) // 4):
            if N % t == 0:
                nt = t
                break
            t -= 8
    grid_n = pl.cdiv(N, nt)

    # If the whole sequence fits one chunk, grow the mean row tile a bit to
    # amortize per-grid-step overhead (still budget- and divisor-checked).
    if B >= 8 and grid_n == 1:
        while (bm_mean * 2 <= min(64, bm2)
               and Br % (bm_mean * 2) == 0
               and 2 * (bm_mean * 2) * nt * D * itemsize <= x_budget):
            bm_mean *= 2
    grid_rows1 = Br // bm_mean
    grid_rows2 = Br // bm2

    # ---- stage-2 hidden tile: resident weights whenever they fit ----
    full_w_bytes = 4 * (D * Hp + Hp * Dp)     # bf16, 2 pipeline buffers each
    if full_w_bytes <= w_budget:
        th = Hp                               # fully resident, streamed once
    else:
        th = 128
        t = 128
        while t <= Hp:
            if Hp % t == 0 and 4 * (D * t + t * Dp) <= w_budget:
                th = t
            t += 128
    grid_h = Hp // th

    # ---- small host-side weight/bias padding only (zero pad keeps math exact:
    # padded hidden/output columns stay 0 through ReLU and never reach the
    # L2 norm; padded batch rows of xm/out are garbage but sliced off). ----
    w1_p = jnp.pad(w1, ((0, 0), (0, Hp - H))).astype(bf16)          # (D, Hp)
    b1_p = jnp.pad(b1, ((0, 0), (0, Hp - H))).astype(f32)           # (1, Hp)
    w2_p = jnp.pad(w2, ((0, Hp - H), (0, Dp - D))).astype(bf16)     # (Hp, Dp)
    b2_p = jnp.pad(b2, ((0, 0), (0, Dp - D))).astype(f32)           # (1, Dp)

    # ---- stage 1: mean over N -> xm (Br, D) bf16 (MXU input dtype) ----
    mean_cost = pl.CostEstimate(
        flops=int(B) * int(N) * int(D),
        transcendentals=0,
        bytes_accessed=int(B * N * D * itemsize + Br * D * 2),
    )
    xm = pl.pallas_call(
        functools.partial(_mean_kernel, inv_n=1.0 / N, n_total=N, block_n=nt),
        out_shape=jax.ShapeDtypeStruct((Br, D), bf16),
        grid_spec=pltpu.PrefetchScalarGridSpec(
            num_scalar_prefetch=0,
            grid=(grid_rows1, grid_n),
            in_specs=[pl.BlockSpec((bm_mean, nt, D), lambda i, n: (i, n, 0))],
            out_specs=pl.BlockSpec((bm_mean, D), lambda i, n: (i, 0)),
            scratch_shapes=[pltpu.VMEM((bm_mean, D), f32)],
        ),
        compiler_params=pltpu.CompilerParams(
            dimension_semantics=("parallel", "arbitrary"),
            vmem_limit_bytes=int(vmem_limit),
        ),
        cost_estimate=mean_cost,
    )(x)

    # ---- stage 2: fused linear1+ReLU -> linear2+ReLU -> L2 normalize ----
    w_streams = grid_rows2 if th < Hp else 1
    mlp_cost = pl.CostEstimate(
        flops=2 * int(Br) * int(Hp) * (int(D) + int(Dp)),
        transcendentals=int(Br),
        bytes_accessed=int(
            Br * D * 2                                   # xm (bf16)
            + w_streams * (D * Hp * 2 + Hp * Dp * 2)     # weights (bf16)
            + Hp * 4 + Dp * 4                            # biases (f32)
            + Br * Dp * 4                                # out (f32)
        ),
    )
    out_p = pl.pallas_call(
        _mlp_kernel,
        out_shape=jax.ShapeDtypeStruct((Br, Dp), f32),
        grid_spec=pltpu.PrefetchScalarGridSpec(
            num_scalar_prefetch=0,
            grid=(grid_rows2, grid_h),
            in_specs=[
                pl.BlockSpec((bm2, D), lambda i, j: (i, 0)),   # xm row tile
                pl.BlockSpec((D, th), lambda i, j: (0, j)),    # w1 (resident if th==Hp)
                pl.BlockSpec((1, th), lambda i, j: (0, j)),    # b1
                pl.BlockSpec((th, Dp), lambda i, j: (j, 0)),   # w2 (resident if th==Hp)
                pl.BlockSpec((1, Dp), lambda i, j: (0, 0)),    # b2 (finalize only)
            ],
            out_specs=pl.BlockSpec((bm2, Dp), lambda i, j: (i, 0)),
            scratch_shapes=[pltpu.VMEM((bm2, Dp), f32)],
        ),
        compiler_params=pltpu.CompilerParams(
            dimension_semantics=("parallel", "arbitrary"),
            vmem_limit_bytes=int(vmem_limit),
        ),
        cost_estimate=mlp_cost,
    )(xm, w1_p, b1_p, w2_p, b2_p)

    return out_p[:B, :D]


def init_params(key, input_dim):
    # Deterministic synthetic init (shapes match nn.Linear(D, 2D) / nn.Linear(2D, D)).
    k1, k2, k3, k4 = jax.random.split(key, 4)
    D = input_dim
    w1 = jax.random.normal(k1, (D, 2 * D), jnp.float32) * (1.0 / jnp.sqrt(D))
    b1 = jax.random.normal(k2, (1, 2 * D), jnp.float32) * 0.02
    w2 = jax.random.normal(k3, (2 * D, D), jnp.float32) * (1.0 / jnp.sqrt(2 * D))
    b2 = jax.random.normal(k4, (1, D), jnp.float32) * 0.02
    return w1, b1, w2, b2


if __name__ == "__main__":
    B, N, D = 2, 8, 32  # batch, seq, input_dim
    key = jax.random.PRNGKey(0)
    kx, kp = jax.random.split(key)
    x = jax.random.normal(kx, (B, N, D), jnp.float32)
    w1, b1, w2, b2 = init_params(kp, D)

    out = mlp_forward(x, w1, b1, w2, b2)
    jax.block_until_ready(out)
    assert out.shape == (B, D)

    # Reference 1: mirrors the kernel's precision choices exactly
    # (bf16 MXU operands, f32 accumulation / bias / ReLU / normalize).
    xm = x.mean(axis=1)
    w1_bf, w2_bf = w1.astype(jnp.bfloat16), w2.astype(jnp.bfloat16)
    h = jnp.maximum(
        jnp.dot(xm.astype(jnp.bfloat16), w1_bf, preferred_element_type=jnp.float32) + b1,
        0.0,
    )
    y = jnp.maximum(
        jnp.dot(h.astype(jnp.bfloat16), w2_bf, preferred_element_type=jnp.float32) + b2,
        0.0,
    )
    ref_bf = y * jax.lax.rsqrt(jnp.maximum(jnp.sum(y * y, axis=1, keepdims=True), 1e-24))
    assert jnp.allclose(out, ref_bf, atol=2e-3, rtol=2e-3), float(
        jnp.max(jnp.abs(out - ref_bf))
    )

    # Reference 2: pure-f32 forward of the original module (looser tolerance —
    # the only deltas come from the bf16 MXU operands).
    h32 = jnp.maximum(xm @ w1 + b1, 0.0)
    y32 = jnp.maximum(h32 @ w2 + b2, 0.0)
    ref_f32 = y32 / jnp.maximum(jnp.linalg.norm(y32, axis=1, keepdims=True), 1e-12)
    assert jnp.allclose(out, ref_f32, atol=3e-2, rtol=3e-2), float(
        jnp.max(jnp.abs(out - ref_f32))
    )

    print("KERNEL_OK")
</pallas_src>

<mosaic_0001>
module attributes {stable_mosaic.version = 11 : i64} {
  func.func @_mean_kernel(%arg0: i32, %arg1: i32, %arg2: memref<2x8x32xf32, #tpu.memory_space<vmem>>, %arg3: memref<2x32xbf16, #tpu.memory_space<vmem>>, %arg4: memref<2x32xf32, #tpu.memory_space<vmem>>) attributes {dimension_semantics = [#tpu.dimension_semantics<parallel>, #tpu.dimension_semantics<arbitrary>], iteration_bounds = array<i64: 1, 1>, scalar_prefetch = 0 : i64, scratch_operands = 1 : i64, tpu.core_type = #tpu.core_type<tc>, window_params = [{transform_indices = @transform_0, window_bounds = array<i64: 2, 8, 32>}, {transform_indices = @transform_1, window_bounds = array<i64: 2, 32>}]} {
    %c0_i32 = arith.constant 0 : i32
    %0 = arith.cmpi eq, %arg1, %c0_i32 : i32
    %1 = arith.extui %0 : i1 to i32
    %c0_i32_0 = arith.constant 0 : i32
    %2 = arith.cmpi ne, %1, %c0_i32_0 : i32
    scf.if %2 {
      %cst_9 = arith.constant 0.000000e+00 : f32
      %11 = vector.broadcast %cst_9 : f32 to vector<2x32xf32>
      %c0_10 = arith.constant 0 : index
      %c0_11 = arith.constant 0 : index
      %12 = vector.load %arg4[%c0_10, %c0_11] : memref<2x32xf32, #tpu.memory_space<vmem>>, vector<2x32xf32>
      tpu.vector_store %arg4[%c0_10, %c0_11], %11 {strides = array<i32>} : memref<2x32xf32, #tpu.memory_space<vmem>>, vector<2x32xf32>,
    } else {
    }
    %c0 = arith.constant 0 : index
    %c0_1 = arith.constant 0 : index
    %c0_2 = arith.constant 0 : index
    %3 = vector.load %arg2[%c0, %c0_1, %c0_2] : memref<2x8x32xf32, #tpu.memory_space<vmem>>, vector<2x8x32xf32>
    %c0_3 = arith.constant 0 : index
    %c0_4 = arith.constant 0 : index
    %4 = vector.load %arg4[%c0_3, %c0_4] : memref<2x32xf32, #tpu.memory_space<vmem>>, vector<2x32xf32>
    %cst = arith.constant dense<0.000000e+00> : vector<2x32xf32>
    %5 = vector.multi_reduction <add>, %3, %cst [1] : vector<2x8x32xf32> to vector<2x32xf32>
    %6 = arith.addf %4, %5 : vector<2x32xf32>
    %c0_5 = arith.constant 0 : index
    %c0_6 = arith.constant 0 : index
    %7 = vector.load %arg4[%c0_5, %c0_6] : memref<2x32xf32, #tpu.memory_space<vmem>>, vector<2x32xf32>
    tpu.vector_store %arg4[%c0_5, %c0_6], %6 {strides = array<i32>} : memref<2x32xf32, #tpu.memory_space<vmem>>, vector<2x32xf32>,
    %c0_i32_7 = arith.constant 0 : i32
    %8 = arith.cmpi eq, %arg1, %c0_i32_7 : i32
    %9 = arith.extui %8 : i1 to i32
    %c0_i32_8 = arith.constant 0 : i32
    %10 = arith.cmpi ne, %9, %c0_i32_8 : i32
    scf.if %10 {
      %c0_9 = arith.constant 0 : index
      %c0_10 = arith.constant 0 : index
      %11 = vector.load %arg4[%c0_9, %c0_10] : memref<2x32xf32, #tpu.memory_space<vmem>>, vector<2x32xf32>
      %cst_11 = arith.constant 1.250000e-01 : f32
      %12 = vector.broadcast %cst_11 : f32 to vector<2x32xf32>
      %13 = arith.mulf %11, %12 : vector<2x32xf32>
      %14 = arith.truncf %13 : vector<2x32xf32> to vector<2x32xbf16>
      %c0_12 = arith.constant 0 : index
      %c0_13 = arith.constant 0 : index
      %15 = vector.load %arg3[%c0_12, %c0_13] : memref<2x32xbf16, #tpu.memory_space<vmem>>, vector<2x32xbf16>
      tpu.vector_store %arg3[%c0_12, %c0_13], %14 {strides = array<i32>} : memref<2x32xbf16, #tpu.memory_space<vmem>>, vector<2x32xbf16>,
    } else {
    }
    return
  }
  func.func @transform_0(%arg0: i32, %arg1: i32) -> (i32, i32, i32) {
    %c0_i32 = arith.constant 0 : i32
    %c0_i32_0 = arith.constant 0 : i32
    return %arg0, %arg1, %c0_i32 : i32, i32, i32
  }
  func.func @transform_1(%arg0: i32, %arg1: i32) -> (i32, i32) {
    %c0_i32 = arith.constant 0 : i32
    %c0_i32_0 = arith.constant 0 : i32
    return %arg0, %c0_i32 : i32, i32
  }
}

</mosaic_0001>

<llo_original>
// kernel: tpu_custom_call.1
$region0: #{tpu_custom_call.1}
  #allocation0 [shape = 'u32[]', space=smem, size = 0x4, offset = 0x4, fixed_abs, tag = 'smem constant byte address 0x4 - core index']
  #allocation1 [shape = 'u32[144,128]{1,0:T(1,128)}', space=vmem, size = 0x12000, scoped, tag = 'internal scratch']
  #allocation2 [shape = 'f32[2,32]{1,0:T(2,128)}', space=vmem, size = 0x400, scoped, tag = 'scratch operand']
  %s0 = inlined_call_operand.hbm [shape: f32[2,8,32], index: 0, kind: input, shape index: {}]
  %s1 = inlined_call_operand.hbm [shape: bf16[2,32], index: 1, kind: output, shape index: {}]
  %s2 = sld [smem:[#allocation0]]
  $region26: #{tpu_custom_call.1} parent=0
    _
  %s4 = ssub.s32 1, %s2
  %s5 = scalar_select 0, %s4, %s2
  $region1: #{tpu_custom_call.1} parent=0
    #allocation3 [shape = 'u8[8192]{0}', space=vmem, size = 0x2000, scoped, tag = 'input window, operand 0, single buffered']
    #allocation4 [shape = 's32[1]{0}', space=sflag, size = 0x4, scoped, tag = 'scoped memory for tpu_custom_call.1']
    #allocation5 [shape = 's32[1]{0}', space=sflag, size = 0x4, scoped, tag = 'scoped memory for tpu_custom_call.1']
    #allocation6 [shape = 'u8[512]{0}', space=vmem, size = 0x400, scoped, tag = 'output window, operand 0, single buffered']
    %6 = vsyncpa [#allocation4], 0
    %7 = vsyncpa [#allocation5], 0
    // Predicated region
    $region2: #{tpu_custom_call.1} parent=1 // pred_check
      _
    $region3: #{tpu_custom_call.1} parent=1 // pred_check_branch
      %9 = sbr.rel (0) target = $region5
    $region4: #{tpu_custom_call.1} parent=1 // pred_region
      %s11 = ssub.s32 256, 256
      %12 = vsyncadd [#allocation4], %s11
      %s13 = sshll.u32 [#allocation3], 4
      %s14 = int_to_ptr.vmem [resolvable:$true] %s13
      %19 = dma.hbm_to_vmem [thread:$0]  %s0, 256, %s14, [#allocation4], 128, 128, 8
    $region5: #{tpu_custom_call.1} parent=1 // pred_fallthru
      _
    // Predicated region
    $region6: #{tpu_custom_call.1} parent=1 // pred_check
      _
    $region7: #{tpu_custom_call.1} parent=1 // pred_check_branch
      %21 = sbr.rel (0) target = $region9
    $region8: #{tpu_custom_call.1} parent=1 // pred_region
      %22 = dma.done [#allocation4], 256
    $region9: #{tpu_custom_call.1} parent=1 // pred_fallthru
      _
    %p23 = scmp.eq.s32.totalorder 0, 0
    // Predicated region
    $region10: #{tpu_custom_call.1} parent=1 // pred_check
      %p24 = pneg %p23
    $region11: #{tpu_custom_call.1} parent=1 // pred_check_branch
      %26 = sbr.rel (%p24) target = $region13
    $region12: #{tpu_custom_call.1} parent=1 // pred_region
      %vm27 = vcmask 254976
      %28 = vst.msk [vmem:[#allocation2] sm:$0x3] %vm27, 0.0
    $region13: #{tpu_custom_call.1} parent=1 // pred_fallthru
      _
    %v29 = vld [vmem:[#allocation3] sm:$0xff]
    %v30 = vld [vmem:[#allocation3 + $0x8] sm:$0xff]
    %v31 = vld [vmem:[#allocation2] sm:$0x3]
    %vm32 = vcmask 261120
    %v33 = vsel %vm32, %v29, 0.0
    %v34 = vrot.slane %v33, 4
    %v35 = vadd.f32 %v33, %v34
    %v36 = vrot.slane %v35, 2
    %v37 = vadd.f32 %v35, %v36
    %v38 = vrot.slane %v37, 1
    %v39 = vadd.f32 %v37, %v38
    %v40 = vsel %vm32, %v30, 0.0
    %v41 = vrot.slane %v40, 4
    %v42 = vadd.f32 %v40, %v41
    %v43 = vrot.slane %v42, 2
    %v44 = vadd.f32 %v42, %v43
    %v45 = vrot.slane %v44, 1
    %v46 = vadd.f32 %v44, %v45
    %vm49 = vcmask 1041409
    %v50 = vsel %vm49, %v46, %v39
    %v52 = vadd.f32 %v31, %v50
    %vm53 = vcmask 254976
    %54 = vst.msk [vmem:[#allocation2] sm:$0x3] %vm53, %v52
    // Predicated region
    $region14: #{tpu_custom_call.1} parent=1 // pred_check
      %p55 = pneg %p23
    $region15: #{tpu_custom_call.1} parent=1 // pred_check_branch
      %57 = sbr.rel (%p55) target = $region17
    $region16: #{tpu_custom_call.1} parent=1 // pred_region
      %v58 = vld [vmem:[#allocation2] sm:$0x3]
      %v59 = vmul.f32 %v58, 0.125
      %v60 = vpack.c.bf16 %v59, %v59
      %vm61 = vcmask 253952
      %62 = vst.msk [vmem:[#allocation6] sm:$0x1] %vm61, %v60
    $region17: #{tpu_custom_call.1} parent=1 // pred_fallthru
      _
    // Predicated region
    $region18: #{tpu_custom_call.1} parent=1 // pred_check
      _
    $region19: #{tpu_custom_call.1} parent=1 // pred_check_branch
      %64 = sbr.rel (0) target = $region21
    $region20: #{tpu_custom_call.1} parent=1 // pred_region
      %s66 = ssub.s32 16, 16
      %67 = vsyncadd [#allocation5], %s66
      %s69 = sshll.u32 [#allocation6], 4
      %s70 = int_to_ptr.vmem [resolvable:$true] %s69
      %72 = dma.vmem_to_hbm [thread:$0]  %s70, 16, %s1, [#allocation5]
    $region21: #{tpu_custom_call.1} parent=1 // pred_fallthru
      _
    // Predicated region
    $region22: #{tpu_custom_call.1} parent=1 // pred_check
      _
    $region23: #{tpu_custom_call.1} parent=1 // pred_check_branch
      %74 = sbr.rel (0) target = $region25
    $region24: #{tpu_custom_call.1} parent=1 // pred_region
      %75 = dma.done [#allocation5], 16
    $region25: #{tpu_custom_call.1} parent=1 // pred_fallthru
      _
    %76 = vsyncpa [#allocation4], 1
    %77 = vsyncpa [#allocation5], 1

</llo_original>
